<compile_context>
chip_gen: v5e
topology: v5e:2x2
jax: 0.10.0
libtpu: 0.0.40
codegen_flags: <defaults>
</compile_context>

<pallas_src>
import jax
import jax.numpy as jnp
from jax.experimental import pallas as pl
from jax.experimental.pallas import tpu as pltpu

_LANE = 128


def _round_up(x, m):
    return ((x + m - 1) // m) * m


def _classifier_kernel(x_ref, w1_ref, b1_ref, w2_ref, b2_ref, o_ref):
    # Cast the f32 activations to bf16 in-kernel (VPU pass; VALU slots are idle here).
    x_bf16 = x_ref[...].astype(jnp.bfloat16)
    # Linear1 (BN pre-folded into w1/b1): bf16 x bf16 on the MXU, f32 accumulation.
    h = jnp.dot(x_bf16, w1_ref[...], preferred_element_type=jnp.float32)
    h = h + b1_ref[...]          # f32 bias add
    h = jnp.maximum(h, 0.0)      # ReLU in f32
    # Dropout(p=0.5) -> identity in eval mode.
    # Linear2: cast activations to bf16 for the MXU, accumulate in f32.
    out = jnp.dot(h.astype(jnp.bfloat16), w2_ref[...],
                  preferred_element_type=jnp.float32)
    out = out + b2_ref[...]
    o_ref[...] = out.astype(o_ref.dtype)   # bf16 store (halves writeback traffic)


def out_classifier_pallas(x, params, *, block_b=1024, min_tiles=1):
    """x: (B, C_in) float32. params: dict from init_params (BN folded, class dim lane-padded).

    block_b:   max batch-tile size (rounded to a multiple of 8 sublanes).
    min_tiles: keep at least this many batch tiles (set >=2 on v7x so both TCs get work;
               leave at 1 on single-TC v5e/v6e to avoid extra per-step overhead).
    """
    B, C_in = x.shape
    H = params["w1"].shape[1]
    Np = params["w2"].shape[1]               # lane-padded class dim (multiple of 128)
    num_classes = params["num_classes"]

    # Tile selection: as large as block_b allows, but honor min_tiles for megacore sharding.
    nt = max(int(min_tiles), pl.cdiv(B, int(block_b)))
    TB = max(8, _round_up(pl.cdiv(B, nt), 8))
    grid = (pl.cdiv(B, TB),)                  # partial last block handled by Pallas clipping

    # VMEM budget from the actual footprint: double-buffered x (f32) / out (bf16) tiles,
    # resident weights, plus the in-kernel intermediates (h f32/bf16, out f32 pre-store).
    tile_bytes = 2 * (TB * C_in * 4) + 2 * (TB * Np * 2)
    weight_bytes = (C_in * H * 2) + (H * Np * 2) + (H + Np) * 4
    inter_bytes = TB * H * 4 + TB * H * 2 + TB * C_in * 2 + TB * Np * 4
    vmem_limit = int(min(4 * (tile_bytes + weight_bytes + inter_bytes), 32 << 20))

    cost = pl.CostEstimate(
        flops=2 * B * (C_in * H + H * Np),
        transcendentals=0,
        bytes_accessed=B * C_in * 4 + B * Np * 2 + weight_bytes,
    )

    out_padded = pl.pallas_call(
        _classifier_kernel,
        out_shape=jax.ShapeDtypeStruct((B, Np), jnp.bfloat16),
        grid=grid,
        in_specs=[
            pl.BlockSpec((TB, C_in), lambda i: (i, 0)),    # x tile f32 (pipelined over batch)
            pl.BlockSpec((C_in, H), lambda i: (0, 0)),     # W1' bf16 (resident)
            pl.BlockSpec((1, H), lambda i: (0, 0)),        # b1' f32 (resident)
            pl.BlockSpec((H, Np), lambda i: (0, 0)),       # W2 bf16, lane-padded (resident)
            pl.BlockSpec((1, Np), lambda i: (0, 0)),       # b2 f32, lane-padded (resident)
        ],
        out_specs=pl.BlockSpec((TB, Np), lambda i: (i, 0)),
        compiler_params=pltpu.CompilerParams(
            dimension_semantics=("parallel",),
            vmem_limit_bytes=vmem_limit,
        ),
        cost_estimate=cost,
    )(x, params["w1"], params["b1"], params["w2"], params["b2"])

    # Slice away the lane padding; only the tiny (B, num_classes) result is cast back to f32.
    return out_padded[:, :num_classes].astype(jnp.float32)


def init_params(key, in_channels, hidden_dim=256, num_classes=8, eps=1e-5):
    """Deterministic synthetic parameters matching the nn.Module shapes, BN folded into Linear1."""
    k1, k2, k3, k4, k5, k6 = jax.random.split(key, 6)
    # Linear1: weight stored pre-transposed as (C_in, H), bias (1, H).
    w1 = jax.random.normal(k1, (in_channels, hidden_dim), jnp.float32) * 0.05
    b1 = jax.random.normal(k2, (1, hidden_dim), jnp.float32) * 0.05
    # BatchNorm1d(H) eval-mode affine (non-trivial gamma/beta to exercise the fold).
    gamma = 1.0 + 0.1 * jax.random.normal(k3, (hidden_dim,), jnp.float32)
    beta = 0.1 * jax.random.normal(k4, (hidden_dim,), jnp.float32)
    running_mean = jnp.zeros((hidden_dim,), jnp.float32)
    running_var = jnp.ones((hidden_dim,), jnp.float32)
    scale = gamma / jnp.sqrt(running_var + eps)
    shift = beta - running_mean * scale
    # Fold BN into Linear1:  (x@W1 + b1)*scale + shift  ==  x@(W1*scale) + (b1*scale + shift)
    w1_f = w1 * scale[None, :]
    b1_f = b1 * scale[None, :] + shift[None, :]
    # Linear2: weight stored pre-transposed as (H, num_classes), bias (1, num_classes).
    w2 = jax.random.normal(k5, (hidden_dim, num_classes), jnp.float32) * 0.05
    b2 = jax.random.normal(k6, (1, num_classes), jnp.float32) * 0.05
    # Zero-pad the class dim to a full 128-lane width for lane-dense stores.
    n_pad = _round_up(num_classes, _LANE)
    w2_p = jnp.zeros((hidden_dim, n_pad), jnp.float32).at[:, :num_classes].set(w2)
    b2_p = jnp.zeros((1, n_pad), jnp.float32).at[:, :num_classes].set(b2)
    return {
        # kernel params (bf16 matmul operands, f32 biases)
        "w1": w1_f.astype(jnp.bfloat16),
        "b1": b1_f,
        "w2": w2_p.astype(jnp.bfloat16),
        "b2": b2_p,
        "num_classes": num_classes,
        # f32 copies for the pure-JAX reference
        "w1_ref": w1_f, "b1_ref": b1_f, "w2_ref": w2, "b2_ref": b2,
    }


def reference(x, p):
    h = jnp.maximum(x @ p["w1_ref"] + p["b1_ref"], 0.0)
    return h @ p["w2_ref"] + p["b2_ref"]


if __name__ == "__main__":
    key = jax.random.PRNGKey(0)
    kx, kx2, kp = jax.random.split(key, 3)

    C_in, H, num_classes = 32, 256, 8
    params = init_params(kp, C_in, hidden_dim=H, num_classes=num_classes)

    # Multi-tile batch (exercises grid pipelining across 4 batch tiles of 128).
    B = 512
    x = jax.random.normal(kx, (B, C_in), jnp.float32)
    out = jax.block_until_ready(out_classifier_pallas(x, params, block_b=128))
    ref = reference(x, params)
    assert out.shape == (B, num_classes)
    assert jnp.allclose(out, ref, atol=2e-2, rtol=2e-2), float(jnp.max(jnp.abs(out - ref)))

    # Default large-tile path + v7x-style >=2 tile split (both TCs get one tile each).
    out_mc = jax.block_until_ready(out_classifier_pallas(x, params, min_tiles=2))
    assert out_mc.shape == (B, num_classes)
    assert jnp.allclose(out_mc, ref, atol=2e-2, rtol=2e-2), float(jnp.max(jnp.abs(out_mc - ref)))

    # Ragged batch (exercises the partial-last-block path, no wrapper padding).
    B2 = 50
    x2 = jax.random.normal(kx2, (B2, C_in), jnp.float32)
    out2 = jax.block_until_ready(out_classifier_pallas(x2, params))
    ref2 = reference(x2, params)
    assert out2.shape == (B2, num_classes)
    assert jnp.allclose(out2, ref2, atol=2e-2, rtol=2e-2), float(jnp.max(jnp.abs(out2 - ref2)))

    print("KERNEL_OK")
</pallas_src>

<mosaic_0001>
module attributes {stable_mosaic.version = 11 : i64} {
  func.func @_classifier_kernel(%arg0: i32, %arg1: memref<128x32xf32, #tpu.memory_space<vmem>>, %arg2: memref<32x256xbf16, #tpu.memory_space<vmem>>, %arg3: memref<1x256xf32, #tpu.memory_space<vmem>>, %arg4: memref<256x128xbf16, #tpu.memory_space<vmem>>, %arg5: memref<1x128xf32, #tpu.memory_space<vmem>>, %arg6: memref<128x128xbf16, #tpu.memory_space<vmem>>) attributes {dimension_semantics = [#tpu.dimension_semantics<parallel>], iteration_bounds = array<i64: 4>, scalar_prefetch = 0 : i64, scratch_operands = 0 : i64, tpu.core_type = #tpu.core_type<tc>, window_params = [{transform_indices = @transform_0, window_bounds = array<i64: 128, 32>}, {pipeline_mode = #tpu.pipeline_mode<synchronous>, transform_indices = @transform_1, window_bounds = array<i64: 32, 256>}, {pipeline_mode = #tpu.pipeline_mode<synchronous>, transform_indices = @transform_2, window_bounds = array<i64: 1, 256>}, {pipeline_mode = #tpu.pipeline_mode<synchronous>, transform_indices = @transform_3, window_bounds = array<i64: 256, 128>}, {pipeline_mode = #tpu.pipeline_mode<synchronous>, transform_indices = @transform_4, window_bounds = array<i64: 1, 128>}, {transform_indices = @transform_5, window_bounds = array<i64: 128, 128>}]} {
    %c0 = arith.constant 0 : index
    %c0_0 = arith.constant 0 : index
    %0 = vector.load %arg1[%c0, %c0_0] : memref<128x32xf32, #tpu.memory_space<vmem>>, vector<128x32xf32>
    %1 = arith.truncf %0 : vector<128x32xf32> to vector<128x32xbf16>
    %c0_1 = arith.constant 0 : index
    %c0_2 = arith.constant 0 : index
    %2 = vector.load %arg2[%c0_1, %c0_2] : memref<32x256xbf16, #tpu.memory_space<vmem>>, vector<32x256xbf16>
    %cst = arith.constant dense<0.000000e+00> : vector<128x256xf32>
    %3 = tpu.matmul %1, %2, %cst {dimension_numbers = #tpu.dot_dimension_numbers<[1], [0], [0], [1], [0, 0, 1, 1], [], []>} : vector<128x32xbf16>, vector<32x256xbf16>, vector<128x256xf32> -> vector<128x256xf32>
    %c0_3 = arith.constant 0 : index
    %c0_4 = arith.constant 0 : index
    %4 = vector.load %arg3[%c0_3, %c0_4] : memref<1x256xf32, #tpu.memory_space<vmem>>, vector<1x256xf32>
    %5 = vector.broadcast %4 : vector<1x256xf32> to vector<128x256xf32>
    %6 = arith.addf %3, %5 : vector<128x256xf32>
    %cst_5 = arith.constant 0.000000e+00 : f32
    %7 = vector.broadcast %cst_5 : f32 to vector<128x256xf32>
    %8 = arith.maximumf %6, %7 : vector<128x256xf32>
    %9 = arith.truncf %8 : vector<128x256xf32> to vector<128x256xbf16>
    %c0_6 = arith.constant 0 : index
    %c0_7 = arith.constant 0 : index
    %10 = vector.load %arg4[%c0_6, %c0_7] : memref<256x128xbf16, #tpu.memory_space<vmem>>, vector<256x128xbf16>
    %cst_8 = arith.constant dense<0.000000e+00> : vector<128x128xf32>
    %11 = tpu.matmul %9, %10, %cst_8 {dimension_numbers = #tpu.dot_dimension_numbers<[1], [0], [0], [1], [0, 0, 1, 1], [], []>} : vector<128x256xbf16>, vector<256x128xbf16>, vector<128x128xf32> -> vector<128x128xf32>
    %c0_9 = arith.constant 0 : index
    %c0_10 = arith.constant 0 : index
    %12 = vector.load %arg5[%c0_9, %c0_10] : memref<1x128xf32, #tpu.memory_space<vmem>>, vector<1x128xf32>
    %13 = vector.broadcast %12 : vector<1x128xf32> to vector<128x128xf32>
    %14 = arith.addf %11, %13 : vector<128x128xf32>
    %15 = arith.truncf %14 : vector<128x128xf32> to vector<128x128xbf16>
    %c0_11 = arith.constant 0 : index
    %c0_12 = arith.constant 0 : index
    %16 = vector.load %arg6[%c0_11, %c0_12] : memref<128x128xbf16, #tpu.memory_space<vmem>>, vector<128x128xbf16>
    tpu.vector_store %arg6[%c0_11, %c0_12], %15 {strides = array<i32>} : memref<128x128xbf16, #tpu.memory_space<vmem>>, vector<128x128xbf16>,
    return
  }
  func.func @transform_0(%arg0: i32) -> (i32, i32) {
    %c0_i32 = arith.constant 0 : i32
    %c0_i32_0 = arith.constant 0 : i32
    return %arg0, %c0_i32 : i32, i32
  }
  func.func @transform_1(%arg0: i32) -> (i32, i32) {
    %c0_i32 = arith.constant 0 : i32
    %c0_i32_0 = arith.constant 0 : i32
    %c0_i32_1 = arith.constant 0 : i32
    return %c0_i32, %c0_i32_0 : i32, i32
  }
  func.func @transform_2(%arg0: i32) -> (i32, i32) {
    %c0_i32 = arith.constant 0 : i32
    %c0_i32_0 = arith.constant 0 : i32
    %c0_i32_1 = arith.constant 0 : i32
    return %c0_i32, %c0_i32_0 : i32, i32
  }
  func.func @transform_3(%arg0: i32) -> (i32, i32) {
    %c0_i32 = arith.constant 0 : i32
    %c0_i32_0 = arith.constant 0 : i32
    %c0_i32_1 = arith.constant 0 : i32
    return %c0_i32, %c0_i32_0 : i32, i32
  }
  func.func @transform_4(%arg0: i32) -> (i32, i32) {
    %c0_i32 = arith.constant 0 : i32
    %c0_i32_0 = arith.constant 0 : i32
    %c0_i32_1 = arith.constant 0 : i32
    return %c0_i32, %c0_i32_0 : i32, i32
  }
  func.func @transform_5(%arg0: i32) -> (i32, i32) {
    %c0_i32 = arith.constant 0 : i32
    %c0_i32_0 = arith.constant 0 : i32
    return %arg0, %c0_i32 : i32, i32
  }
}

</mosaic_0001>

<llo_original>
// kernel: tpu_custom_call.1
$region0: #{tpu_custom_call.1}
  #allocation0 [shape = 'u32[]', space=smem, size = 0x4, offset = 0x4, fixed_abs, tag = 'smem constant byte address 0x4 - core index']
  #allocation1 [shape = 'u32[72,128]{1,0:T(1,128)}', space=vmem, size = 0x9000, scoped, tag = 'internal scratch']
  %s0 = inlined_call_operand.vmem [shape: f32[512,32], index: 0, kind: input, shape index: {}]
  %s1 = inlined_call_operand.vmem [shape: bf16[32,256], index: 1, kind: input, shape index: {}]
  %s2 = inlined_call_operand.vmem [shape: f32[1,256], index: 2, kind: input, shape index: {}]
  %s3 = inlined_call_operand.vmem [shape: bf16[256,128], index: 3, kind: input, shape index: {}]
  %s4 = inlined_call_operand.vmem [shape: f32[1,128], index: 4, kind: input, shape index: {}]
  %s5 = inlined_call_operand.hbm [shape: bf16[512,128], index: 5, kind: output, shape index: {}]
  %s6 = sld [smem:[#allocation0]]
  $region53: #{tpu_custom_call.1} parent=0
    _
  %s8 = ssub.s32 1, %s6
  %s9 = scalar_select 0, %s8, %s6
  $region1: #{tpu_custom_call.1} parent=0
    #allocation2 [shape = 'u8[65536]{0}', space=vmem, size = 0x10000, scoped, tag = 'output window, operand 0']
    #allocation3 [shape = 's32[2]{0}', space=sflag, size = 0x8, scoped, tag = 'scoped memory for tpu_custom_call.1']
    %10 = vsyncpa [#allocation3], 0
    %s11 = scalar_lea.sflag [#allocation3], 1
    %12 = vsyncpa %s11, 0
    loop: start=0, step=1, limit=6
    $region2: #{tpu_custom_call.1} parent=1 // loop_pre_header
      _
    $region3: #{tpu_custom_call.1} parent=1 // loop_header
      %s14 = sphi 0, %s18
      %p15 = scmp.ge.s32.totalorder %s14, 6
      %s24 = sphi 0, %s26
      %s27 = sphi 0, %s24
      %s28 = sphi 0, %s27
      %s44 = sphi 0, %s28
      %s48 = sphi 0, %s48
      %s50 = sphi 0, %s48
      %s51 = sphi 0, %s50
      %s65 = sphi 0, %s51
      %s69 = sphi 0, %s69
      %s71 = sphi 0, %s69
      %s72 = sphi 0, %s71
      %s86 = sphi 0, %s72
      %s90 = sphi 0, %s90
      %s92 = sphi 0, %s90
      %s93 = sphi 0, %s92
      %s107 = sphi 0, %s93
      %s111 = sphi 0, %s111
      %s113 = sphi 0, %s111
      %s114 = sphi 0, %s113
      %s128 = sphi 0, %s114
      %s134 = sphi 0, %s136
      %s137 = sphi 0, %s134
      %s138 = sphi 0, %s137
      %s154 = sphi 0, %s138
    $region4: #{tpu_custom_call.1} parent=1 // loop_header_branch
      %17 = sbr.rel (%p15) target = $region8
    $region5: #{tpu_custom_call.1} parent=1 // loop_body
      %s19 = ssub.s32 %s14, 1
      %s20 = ssub.s32 %s14, 2
      %s21 = sadd.s32 %s14, 1
      %s22 = ssub.s32 %s14, %s21
      %p23 = scmp.eq.s32.totalorder %s22, 0
      %s25 = sadd.s32 %s24, 1
      %s26 = scalar_select %p23, %s24, %s25
      %p29 = pneg %p23
      %p30 = scmp.eq.s32.totalorder %s14, 3
      %p31 = por %p29, %p30
      %p32 = scmp.ne.s32.totalorder %s24, %s27
      %p33 = scmp.eq.s32.totalorder %s14, 0
      %p34 = por %p32, %p33
      %p35 = scmp.ne.s32.totalorder %s24, %s27
      %p36 = scmp.eq.s32.totalorder %s19, 3
      %p37 = por %p35, %p36
      %p38 = scmp.ne.s32.totalorder %s27, %s28
      %p39 = scmp.eq.s32.totalorder %s19, 0
      %p40 = por %p38, %p39
      %p41 = scmp.ne.s32.totalorder %s27, %s28
      %p42 = scmp.eq.s32.totalorder %s20, 3
      %p43 = por %p41, %p42
      %p45 = scmp.ne.s32.totalorder %s28, %s44
      %p46 = scmp.eq.s32.totalorder %s20, 0
      %p47 = por %p45, %p46
      %s49 = sadd.s32 %s48, 1
      %p52 = scmp.eq.s32.totalorder %s14, 3
      %p53 = scmp.ne.s32.totalorder %s48, %s50
      %p54 = scmp.eq.s32.totalorder %s14, 0
      %p55 = por %p53, %p54
      %p56 = scmp.ne.s32.totalorder %s48, %s50
      %p57 = scmp.eq.s32.totalorder %s19, 3
      %p58 = por %p56, %p57
      %p59 = scmp.ne.s32.totalorder %s50, %s51
      %p60 = scmp.eq.s32.totalorder %s19, 0
      %p61 = por %p59, %p60
      %p62 = scmp.ne.s32.totalorder %s50, %s51
      %p63 = scmp.eq.s32.totalorder %s20, 3
      %p64 = por %p62, %p63
      %p66 = scmp.ne.s32.totalorder %s51, %s65
      %p67 = scmp.eq.s32.totalorder %s20, 0
      %p68 = por %p66, %p67
      %s70 = sadd.s32 %s69, 1
      %p73 = scmp.eq.s32.totalorder %s14, 3
      %p74 = scmp.ne.s32.totalorder %s69, %s71
      %p75 = scmp.eq.s32.totalorder %s14, 0
      %p76 = por %p74, %p75
      %p77 = scmp.ne.s32.totalorder %s69, %s71
      %p78 = scmp.eq.s32.totalorder %s19, 3
      %p79 = por %p77, %p78
      %p80 = scmp.ne.s32.totalorder %s71, %s72
      %p81 = scmp.eq.s32.totalorder %s19, 0
      %p82 = por %p80, %p81
      %p83 = scmp.ne.s32.totalorder %s71, %s72
      %p84 = scmp.eq.s32.totalorder %s20, 3
      %p85 = por %p83, %p84
      %p87 = scmp.ne.s32.totalorder %s72, %s86
      %p88 = scmp.eq.s32.totalorder %s20, 0
      %p89 = por %p87, %p88
      %s91 = sadd.s32 %s90, 1
      %p94 = scmp.eq.s32.totalorder %s14, 3
      %p95 = scmp.ne.s32.totalorder %s90, %s92
      %p96 = scmp.eq.s32.totalorder %s14, 0
      %p97 = por %p95, %p96
      %p98 = scmp.ne.s32.totalorder %s90, %s92
      %p99 = scmp.eq.s32.totalorder %s19, 3
      %p100 = por %p98, %p99
      %p101 = scmp.ne.s32.totalorder %s92, %s93
      %p102 = scmp.eq.s32.totalorder %s19, 0
      %p103 = por %p101, %p102
      %p104 = scmp.ne.s32.totalorder %s92, %s93
      %p105 = scmp.eq.s32.totalorder %s20, 3
      %p106 = por %p104, %p105
      %p108 = scmp.ne.s32.totalorder %s93, %s107
      %p109 = scmp.eq.s32.totalorder %s20, 0
      %p110 = por %p108, %p109
      %s112 = sadd.s32 %s111, 1
      %p115 = scmp.eq.s32.totalorder %s14, 3
      %p116 = scmp.ne.s32.totalorder %s111, %s113
      %p117 = scmp.eq.s32.totalorder %s14, 0
      %p118 = por %p116, %p117
      %p119 = scmp.ne.s32.totalorder %s111, %s113
      %p120 = scmp.eq.s32.totalorder %s19, 3
      %p121 = por %p119, %p120
      %p122 = scmp.ne.s32.totalorder %s113, %s114
      %p123 = scmp.eq.s32.totalorder %s19, 0
      %p124 = por %p122, %p123
      %p125 = scmp.ne.s32.totalorder %s113, %s114
      %p126 = scmp.eq.s32.totalorder %s20, 3
      %p127 = por %p125, %p126
      %p129 = scmp.ne.s32.totalorder %s114, %s128
      %p130 = scmp.eq.s32.totalorder %s20, 0
      %p131 = por %p129, %p130
      %s132 = ssub.s32 %s14, %s21
      %p133 = scmp.eq.s32.totalorder %s132, 0
      %s135 = sadd.s32 %s134, 1
      %s136 = scalar_select %p133, %s134, %s135
      %p139 = pneg %p133
      %p140 = scmp.eq.s32.totalorder %s14, 3
      %p141 = por %p139, %p140
      %p142 = scmp.ne.s32.totalorder %s134, %s137
      %p143 = scmp.eq.s32.totalorder %s14, 0
      %p144 = por %p142, %p143
      %p145 = scmp.ne.s32.totalorder %s134, %s137
      %p146 = scmp.eq.s32.totalorder %s19, 3
      %p147 = por %p145, %p146
      %p148 = scmp.ne.s32.totalorder %s137, %s138
      %p149 = scmp.eq.s32.totalorder %s19, 0
      %p150 = por %p148, %p149
      %p151 = scmp.ne.s32.totalorder %s137, %s138
      %p152 = scmp.eq.s32.totalorder %s20, 3
      %p153 = por %p151, %p152
      %p155 = scmp.ne.s32.totalorder %s138, %s154
      %p156 = scmp.eq.s32.totalorder %s20, 0
      %p157 = por %p155, %p156
      %p158 = scmp.le.s32.totalorder 1, %s14
      %p159 = scmp.lt.s32.totalorder %s14, 5
      %p160 = pnand %p158, %p159
      %p161 = pneg %p160
      // Predicated region
      $region9: #{tpu_custom_call.1} parent=5 // pred_check
        _
      $region10: #{tpu_custom_call.1} parent=5 // pred_check_branch
        %163 = sbr.rel (%p160) target = $region12
      $region11: #{tpu_custom_call.1} parent=5 // pred_region
        %s164 = ssub.s32 %s14, 1
        // Predicated region
        $region13: #{tpu_custom_call.1} parent=11 // pred_check
          %p165 = pneg %p61
        $region14: #{tpu_custom_call.1} parent=11 // pred_check_branch
          %167 = sbr.rel (%p165) target = $region16
        $region15: #{tpu_custom_call.1} parent=11 // pred_region
          _
        $region16: #{tpu_custom_call.1} parent=11 // pred_fallthru
          _
        // Predicated region
        $region17: #{tpu_custom_call.1} parent=11 // pred_check
          %p168 = pneg %p82
        $region18: #{tpu_custom_call.1} parent=11 // pred_check_branch
          %170 = sbr.rel (%p168) target = $region20
        $region19: #{tpu_custom_call.1} parent=11 // pred_region
          _
        $region20: #{tpu_custom_call.1} parent=11 // pred_fallthru
          _
        // Predicated region
        $region21: #{tpu_custom_call.1} parent=11 // pred_check
          %p171 = pneg %p103
        $region22: #{tpu_custom_call.1} parent=11 // pred_check_branch
          %173 = sbr.rel (%p171) target = $region24
        $region23: #{tpu_custom_call.1} parent=11 // pred_region
          _
        $region24: #{tpu_custom_call.1} parent=11 // pred_fallthru
          _
        // Predicated region
        $region25: #{tpu_custom_call.1} parent=11 // pred_check
          %p174 = pneg %p124
        $region26: #{tpu_custom_call.1} parent=11 // pred_check_branch
          %176 = sbr.rel (%p174) target = $region28
        $region27: #{tpu_custom_call.1} parent=11 // pred_region
          _
        $region28: #{tpu_custom_call.1} parent=11 // pred_fallthru
          _
      $region12: #{tpu_custom_call.1} parent=5 // pred_fallthru
        _
      %p177 = scmp.lt.s32.totalorder %s14, 4
      // Predicated region
      $region29: #{tpu_custom_call.1} parent=5 // pred_check
        %p178 = pneg %p177
      $region30: #{tpu_custom_call.1} parent=5 // pred_check_branch
        %180 = sbr.rel (%p178) target = $region32
      $region31: #{tpu_custom_call.1} parent=5 // pred_region
        // Predicated region
        $region33: #{tpu_custom_call.1} parent=31 // pred_check
          %p181 = pneg %p34
        $region34: #{tpu_custom_call.1} parent=31 // pred_check_branch
          %183 = sbr.rel (%p181) target = $region36
        $region35: #{tpu_custom_call.1} parent=31 // pred_region
          %s184 = smul.u32 16, %s14
          %p185 = scmp.lt.s32.totalorder %s184, 63
          %s186 = scalar_select %p185, %s184, 63
          %s187 = smul.addr %s186, 8
          %s188 = scalar_lea.vmem %s0, %s187
          %s189 = smul.u32 16, %s14
        $region36: #{tpu_custom_call.1} parent=31 // pred_fallthru
          _
      $region32: #{tpu_custom_call.1} parent=5 // pred_fallthru
        _
      %p190 = scmp.le.s32.totalorder 1, %s14
      %p191 = scmp.lt.s32.totalorder %s14, 5
      %p192 = pnand %p190, %p191
      %p193 = pneg %p192
      // Predicated region
      $region37: #{tpu_custom_call.1} parent=5 // pred_check
        _
      $region38: #{tpu_custom_call.1} parent=5 // pred_check_branch
        %195 = sbr.rel (%p192) target = $region40
      $region39: #{tpu_custom_call.1} parent=5 // pred_region
        %s196 = ssub.s32 %s14, 1
        %s197 = smul.u32 16, %s19
        %p198 = scmp.lt.s32.totalorder %s197, 63
        %s199 = scalar_select %p198, %s197, 63
        %s200 = smul.addr %s199, 8
        %s201 = scalar_lea.vmem %s0, %s200
        %p202 = pneg %p40
        %p203 = pneg %p37
        %p204 = pneg %p61
        %p205 = pneg %p58
        %p206 = pneg %p82
        %p207 = pneg %p79
        %p208 = pneg %p103
        %p209 = pneg %p100
        %p210 = pneg %p124
        %p211 = pneg %p121
        %p212 = pneg %p150
        %p213 = pneg %p147
        %s214 = sand.u32 %s137, 1
        %s215 = scalar_lea.sflag [#allocation3], %s214
        %s216 = sand.u32 %s137, 1
        %s217 = smul.addr %s216, 64
        %s218 = scalar_lea.vmem [#allocation2], %s217
        %s219 = smul.u32 16, %s19
        %p220 = scmp.lt.s32.totalorder %s219, 63
        %s221 = scalar_select %p220, %s219, 63
        %s222 = smul.addr %s221, 8
        %s223 = scalar_lea.vmem %s0, %s222
        %s224 = smul.u32 16, %s19
        %s225 = smul.u32 16, %s19
        %v227 = vld [vmem:[%s223] sm:$0xff]
        %v228 = vld [vmem:[%s223 + $0x8] sm:$0xff]
        %v229 = vld [vmem:[%s223 + $0x10] sm:$0xff]
        %v230 = vld [vmem:[%s223 + $0x18] sm:$0xff]
        %v231 = vld [vmem:[%s223 + $0x20] sm:$0xff]
        %v232 = vld [vmem:[%s223 + $0x28] sm:$0xff]
        %v233 = vld [vmem:[%s223 + $0x30] sm:$0xff]
        %v234 = vld [vmem:[%s223 + $0x38] sm:$0xff]
        %v235 = vld [vmem:[%s223 + $0x40] sm:$0xff]
        %v236 = vld [vmem:[%s223 + $0x48] sm:$0xff]
        %v237 = vld [vmem:[%s223 + $0x50] sm:$0xff]
        %v238 = vld [vmem:[%s223 + $0x58] sm:$0xff]
        %v239 = vld [vmem:[%s223 + $0x60] sm:$0xff]
        %v240 = vld [vmem:[%s223 + $0x68] sm:$0xff]
        %v241 = vld [vmem:[%s223 + $0x70] sm:$0xff]
        %v242 = vld [vmem:[%s223 + $0x78] sm:$0xff]
        %v243 = vpack.c.bf16 %v228, %v227
        %v244 = vpack.c.bf16 %v230, %v229
        %v245 = vpack.c.bf16 %v232, %v231
        %v246 = vpack.c.bf16 %v234, %v233
        %v247 = vpack.c.bf16 %v236, %v235
        %v248 = vpack.c.bf16 %v238, %v237
        %v249 = vpack.c.bf16 %v240, %v239
        %v250 = vpack.c.bf16 %v242, %v241
        %v251 = vld [vmem:[%s1] sm:$0xff]
        %v252 = vld [vmem:[%s1 + $0x8] sm:$0xff]
        %v253 = vld [vmem:[%s1 + $0x10] sm:$0xff]
        %v254 = vld [vmem:[%s1 + $0x18] sm:$0xff]
        %v255 = vld [vmem:[%s2] sm:$0x3]
        %v257 = vperm.slane %v255, 0
        %v258 = vperm.slane %v255, 1
        %v265 = vunpack.c.l.b16 %v251
        %v266 = vunpack.c.h.b16 %v251
        %v267 = vunpack.c.l.b16 %v252
        %v268 = vunpack.c.h.b16 %v252
        %v269 = vunpack.c.l.b16 %v253
        %v270 = vunpack.c.h.b16 %v253
        %v271 = vunpack.c.l.b16 %v254
        %v272 = vunpack.c.h.b16 %v254
        %v273 = vpack.c.b16 %v267, %v265
        %v274 = vpack.c.b16 %v268, %v266
        %v275 = vpack.c.b16 %v271, %v269
        %v276 = vpack.c.b16 %v272, %v270
        %vm281 = vcmask 261120
        %v283 = vsel %vm281, %v243, 0
        %v286 = vsel %vm281, %v244, 0
        %v289 = vsel %vm281, %v245, 0
        %v292 = vsel %vm281, %v246, 0
        %v295 = vsel %vm281, %v247, 0
        %v298 = vsel %vm281, %v248, 0
        %v301 = vsel %vm281, %v249, 0
        %v304 = vsel %vm281, %v250, 0
        %306 = vmatpush.bf16.msra.mxu0 0
        %307 = vmatpush.bf16.msra.mxu0 0
        %308 = vmatpush.bf16.msra.mxu0 0
        %309 = vmatpush.bf16.msra.mxu0 0
        %310 = vmatpush.bf16.msra.mxu0 0
        %311 = vmatpush.bf16.msra.mxu0 0
        %312 = vmatpush.bf16.msra.mxu0 %v275
        %313 = vmatpush.bf16.msra.mxu0 %v273
        %314 = vmatmul.bf16.gmra.mxu0 %v283
        %v315 = vpop.f32.mrf.mxu0
        %v316 = vadd.f32 %v257, %v315
        %v317 = vpop.f32.mrf.mxu0
        %v318 = vadd.f32 %v257, %v317
        %319 = vmatmul.bf16.gmra.mxu0 %v286
        %v320 = vpop.f32.mrf.mxu0
        %v321 = vadd.f32 %v257, %v320
        %v322 = vpop.f32.mrf.mxu0
        %v323 = vadd.f32 %v257, %v322
        %324 = vmatmul.bf16.gmra.mxu0 %v289
        %v325 = vpop.f32.mrf.mxu0
        %v326 = vadd.f32 %v257, %v325
        %v327 = vpop.f32.mrf.mxu0
        %v328 = vadd.f32 %v257, %v327
        %329 = vmatmul.bf16.gmra.mxu0 %v292
        %v330 = vpop.f32.mrf.mxu0
        %v331 = vadd.f32 %v257, %v330
        %v332 = vpop.f32.mrf.mxu0
        %v333 = vadd.f32 %v257, %v332
        %334 = vmatmul.bf16.gmra.mxu0 %v295
        %v335 = vpop.f32.mrf.mxu0
        %v336 = vadd.f32 %v257, %v335
        %v337 = vpop.f32.mrf.mxu0
        %v338 = vadd.f32 %v257, %v337
        %339 = vmatmul.bf16.gmra.mxu0 %v298
        %v340 = vpop.f32.mrf.mxu0
        %v341 = vadd.f32 %v257, %v340
        %v342 = vpop.f32.mrf.mxu0
        %v343 = vadd.f32 %v257, %v342
        %344 = vmatmul.bf16.gmra.mxu0 %v301
        %v345 = vpop.f32.mrf.mxu0
        %v346 = vadd.f32 %v257, %v345
        %v347 = vpop.f32.mrf.mxu0
        %v348 = vadd.f32 %v257, %v347
        %349 = vmatmul.bf16.gmra.mxu0 %v304
        %v350 = vpop.f32.mrf.mxu0
        %v351 = vadd.f32 %v257, %v350
        %v352 = vpop.f32.mrf.mxu0
        %v353 = vadd.f32 %v257, %v352
        %354 = vdwg.mxu0
        %355 = vmatpush.bf16.msra.mxu0 0
        %356 = vmatpush.bf16.msra.mxu0 0
        %357 = vmatpush.bf16.msra.mxu0 0
        %358 = vmatpush.bf16.msra.mxu0 0
        %359 = vmatpush.bf16.msra.mxu0 0
        %360 = vmatpush.bf16.msra.mxu0 0
        %361 = vmatpush.bf16.msra.mxu0 %v276
        %362 = vmatpush.bf16.msra.mxu0 %v274
        %363 = vmatmul.bf16.gmra.mxu0 %v283
        %v364 = vpop.f32.mrf.mxu0
        %v365 = vadd.f32 %v258, %v364
        %v366 = vpop.f32.mrf.mxu0
        %v367 = vadd.f32 %v258, %v366
        %368 = vmatmul.bf16.gmra.mxu0 %v286
        %v369 = vpop.f32.mrf.mxu0
        %v370 = vadd.f32 %v258, %v369
        %v371 = vpop.f32.mrf.mxu0
        %v372 = vadd.f32 %v258, %v371
        %373 = vmatmul.bf16.gmra.mxu0 %v289
        %v374 = vpop.f32.mrf.mxu0
        %v375 = vadd.f32 %v258, %v374
        %v376 = vpop.f32.mrf.mxu0
        %v377 = vadd.f32 %v258, %v376
        %378 = vmatmul.bf16.gmra.mxu0 %v292
        %v379 = vpop.f32.mrf.mxu0
        %v380 = vadd.f32 %v258, %v379
        %v381 = vpop.f32.mrf.mxu0
        %v382 = vadd.f32 %v258, %v381
        %383 = vmatmul.bf16.gmra.mxu0 %v295
        %v384 = vpop.f32.mrf.mxu0
        %v385 = vadd.f32 %v258, %v384
        %v386 = vpop.f32.mrf.mxu0
        %v387 = vadd.f32 %v258, %v386
        %388 = vmatmul.bf16.gmra.mxu0 %v298
        %v389 = vpop.f32.mrf.mxu0
        %v390 = vadd.f32 %v258, %v389
        %v391 = vpop.f32.mrf.mxu0
        %v392 = vadd.f32 %v258, %v391
        %393 = vmatmul.bf16.gmra.mxu0 %v301
        %v394 = vpop.f32.mrf.mxu0
        %v395 = vadd.f32 %v258, %v394
        %v396 = vpop.f32.mrf.mxu0
        %v397 = vadd.f32 %v258, %v396
        %398 = vmatmul.bf16.gmra.mxu0 %v304
        %v399 = vpop.f32.mrf.mxu0
        %v400 = vadd.f32 %v258, %v399
        %v401 = vpop.f32.mrf.mxu0
        %v402 = vadd.f32 %v258, %v401
        %403 = vdwg.mxu0
        %v404 = vmax.f32 %v316, 0.0
        %v405 = vmax.f32 %v365, 0.0
        %v406 = vmax.f32 %v318, 0.0
        %v407 = vmax.f32 %v367, 0.0
        %v408 = vmax.f32 %v321, 0.0
        %v409 = vmax.f32 %v370, 0.0
        %v410 = vmax.f32 %v323, 0.0
        %v411 = vmax.f32 %v372, 0.0
        %v412 = vmax.f32 %v326, 0.0
        %v413 = vmax.f32 %v375, 0.0
        %v414 = vmax.f32 %v328, 0.0
        %v415 = vmax.f32 %v377, 0.0
        %v416 = vmax.f32 %v331, 0.0
        %v417 = vmax.f32 %v380, 0.0
        %v418 = vmax.f32 %v333, 0.0
        %v419 = vmax.f32 %v382, 0.0
        %v420 = vmax.f32 %v336, 0.0
        %v421 = vmax.f32 %v385, 0.0
        %v422 = vmax.f32 %v338, 0.0
        %v423 = vmax.f32 %v387, 0.0
        %v424 = vmax.f32 %v341, 0.0
        %v425 = vmax.f32 %v390, 0.0
        %v426 = vmax.f32 %v343, 0.0
        %v427 = vmax.f32 %v392, 0.0
        %v428 = vmax.f32 %v346, 0.0
        %v429 = vmax.f32 %v395, 0.0
        %v430 = vmax.f32 %v348, 0.0
        %v431 = vmax.f32 %v397, 0.0
        %v432 = vmax.f32 %v351, 0.0
        %v433 = vmax.f32 %v400, 0.0
        %v434 = vmax.f32 %v353, 0.0
        %v435 = vmax.f32 %v402, 0.0
        %v436 = vpack.c.bf16 %v406, %v404
        %v437 = vpack.c.bf16 %v407, %v405
        %v438 = vpack.c.bf16 %v410, %v408
        %v439 = vpack.c.bf16 %v411, %v409
        %v440 = vpack.c.bf16 %v414, %v412
        %v441 = vpack.c.bf16 %v415, %v413
        %v442 = vpack.c.bf16 %v418, %v416
        %v443 = vpack.c.bf16 %v419, %v417
        %v444 = vpack.c.bf16 %v422, %v420
        %v445 = vpack.c.bf16 %v423, %v421
        %v446 = vpack.c.bf16 %v426, %v424
        %v447 = vpack.c.bf16 %v427, %v425
        %v448 = vpack.c.bf16 %v430, %v428
        %v449 = vpack.c.bf16 %v431, %v429
        %v450 = vpack.c.bf16 %v434, %v432
        %v451 = vpack.c.bf16 %v435, %v433
        %v452 = vld [vmem:[%s3] sm:$0xf]
        %v453 = vld [vmem:[%s3 + $0x4] sm:$0xf]
        %v454 = vld [vmem:[%s3 + $0x8] sm:$0xf]
        %v455 = vld [vmem:[%s3 + $0xc] sm:$0xf]
        %v456 = vld [vmem:[%s3 + $0x10] sm:$0xf]
        %v457 = vld [vmem:[%s3 + $0x14] sm:$0xf]
        %v458 = vld [vmem:[%s3 + $0x18] sm:$0xf]
        %v459 = vld [vmem:[%s3 + $0x1c] sm:$0xf]
        %v460 = vld [vmem:[%s3 + $0x20] sm:$0xf]
        %v461 = vld [vmem:[%s3 + $0x24] sm:$0xf]
        %v462 = vld [vmem:[%s3 + $0x28] sm:$0xf]
        %v463 = vld [vmem:[%s3 + $0x2c] sm:$0xf]
        %v464 = vld [vmem:[%s3 + $0x30] sm:$0xf]
        %v465 = vld [vmem:[%s3 + $0x34] sm:$0xf]
        %v466 = vld [vmem:[%s3 + $0x38] sm:$0xf]
        %v467 = vld [vmem:[%s3 + $0x3c] sm:$0xf]
        %v468 = vld [vmem:[%s3 + $0x40] sm:$0xf]
        %v469 = vld [vmem:[%s3 + $0x44] sm:$0xf]
        %v470 = vld [vmem:[%s3 + $0x48] sm:$0xf]
        %v471 = vld [vmem:[%s3 + $0x4c] sm:$0xf]
        %v472 = vld [vmem:[%s3 + $0x50] sm:$0xf]
        %v473 = vld [vmem:[%s3 + $0x54] sm:$0xf]
        %v474 = vld [vmem:[%s3 + $0x58] sm:$0xf]
        %v475 = vld [vmem:[%s3 + $0x5c] sm:$0xf]
        %v476 = vld [vmem:[%s3 + $0x60] sm:$0xf]
        %v477 = vld [vmem:[%s3 + $0x64] sm:$0xf]
        %v478 = vld [vmem:[%s3 + $0x68] sm:$0xf]
        %v479 = vld [vmem:[%s3 + $0x6c] sm:$0xf]
        %v480 = vld [vmem:[%s3 + $0x70] sm:$0xf]
        %v481 = vld [vmem:[%s3 + $0x74] sm:$0xf]
        %v482 = vld [vmem:[%s3 + $0x78] sm:$0xf]
        %v483 = vld [vmem:[%s3 + $0x7c] sm:$0xf]
        %v484 = vld [vmem:[%s4] sm:$0x1]
        %v486 = vperm.slane %v484, 0
        %v520 = vunpack.c.l.b16 %v452
        %v521 = vunpack.c.l.b16 %v453
        %v522 = vunpack.c.l.b16 %v454
        %v523 = vunpack.c.l.b16 %v455
        %v524 = vunpack.c.l.b16 %v456
        %v525 = vunpack.c.l.b16 %v457
        %v526 = vunpack.c.l.b16 %v458
        %v527 = vunpack.c.l.b16 %v459
        %v528 = vunpack.c.l.b16 %v460
        %v529 = vunpack.c.l.b16 %v461
        %v530 = vunpack.c.l.b16 %v462
        %v531 = vunpack.c.l.b16 %v463
        %v532 = vunpack.c.l.b16 %v464
        %v533 = vunpack.c.l.b16 %v465
        %v534 = vunpack.c.l.b16 %v466
        %v535 = vunpack.c.l.b16 %v467
        %v536 = vunpack.c.l.b16 %v468
        %v537 = vunpack.c.l.b16 %v469
        %v538 = vunpack.c.l.b16 %v470
        %v539 = vunpack.c.l.b16 %v471
        %v540 = vunpack.c.l.b16 %v472
        %v541 = vunpack.c.l.b16 %v473
        %v542 = vunpack.c.l.b16 %v474
        %v543 = vunpack.c.l.b16 %v475
        %v544 = vunpack.c.l.b16 %v476
        %v545 = vunpack.c.l.b16 %v477
        %v546 = vunpack.c.l.b16 %v478
        %v547 = vunpack.c.l.b16 %v479
        %v548 = vunpack.c.l.b16 %v480
        %v549 = vunpack.c.l.b16 %v481
        %v550 = vunpack.c.l.b16 %v482
        %v551 = vunpack.c.l.b16 %v483
        %v552 = vpack.c.b16 %v521, %v520
        %v553 = vpack.c.b16 %v523, %v522
        %v554 = vpack.c.b16 %v525, %v524
        %v555 = vpack.c.b16 %v527, %v526
        %v556 = vpack.c.b16 %v529, %v528
        %v557 = vpack.c.b16 %v531, %v530
        %v558 = vpack.c.b16 %v533, %v532
        %v559 = vpack.c.b16 %v535, %v534
        %v560 = vpack.c.b16 %v537, %v536
        %v561 = vpack.c.b16 %v539, %v538
        %v562 = vpack.c.b16 %v541, %v540
        %v563 = vpack.c.b16 %v543, %v542
        %v564 = vpack.c.b16 %v545, %v544
        %v565 = vpack.c.b16 %v547, %v546
        %v566 = vpack.c.b16 %v549, %v548
        %v567 = vpack.c.b16 %v551, %v550
        %584 = vmatpush.bf16.msra.mxu0 %v559
        %585 = vmatpush.bf16.msra.mxu0 %v558
        %586 = vmatpush.bf16.msra.mxu0 %v557
        %587 = vmatpush.bf16.msra.mxu0 %v556
        %588 = vmatpush.bf16.msra.mxu0 %v555
        %589 = vmatpush.bf16.msra.mxu0 %v554
        %590 = vmatpush.bf16.msra.mxu0 %v553
        %591 = vmatpush.bf16.msra.mxu0 %v552
        %592 = vmatmul.bf16.gmra.mxu0 %v436
        %v593 = vpop.f32.mrf.mxu0
        %v594 = vadd.f32 %v486, %v593
        %v595 = vpop.f32.mrf.mxu0
        %v596 = vadd.f32 %v486, %v595
        %597 = vmatmul.bf16.gmra.mxu0 %v438
        %v598 = vpop.f32.mrf.mxu0
        %v599 = vadd.f32 %v486, %v598
        %v600 = vpop.f32.mrf.mxu0
        %v601 = vadd.f32 %v486, %v600
        %602 = vmatmul.bf16.gmra.mxu0 %v440
        %v603 = vpop.f32.mrf.mxu0
        %v604 = vadd.f32 %v486, %v603
        %v605 = vpop.f32.mrf.mxu0
        %v606 = vadd.f32 %v486, %v605
        %607 = vmatmul.bf16.gmra.mxu0 %v442
        %v608 = vpop.f32.mrf.mxu0
        %v609 = vadd.f32 %v486, %v608
        %v610 = vpop.f32.mrf.mxu0
        %v611 = vadd.f32 %v486, %v610
        %612 = vmatmul.bf16.gmra.mxu0 %v444
        %v613 = vpop.f32.mrf.mxu0
        %v614 = vadd.f32 %v486, %v613
        %v615 = vpop.f32.mrf.mxu0
        %v616 = vadd.f32 %v486, %v615
        %617 = vmatmul.bf16.gmra.mxu0 %v446
        %v618 = vpop.f32.mrf.mxu0
        %v619 = vadd.f32 %v486, %v618
        %v620 = vpop.f32.mrf.mxu0
        %v621 = vadd.f32 %v486, %v620
        %622 = vmatmul.bf16.gmra.mxu0 %v448
        %v623 = vpop.f32.mrf.mxu0
        %v624 = vadd.f32 %v486, %v623
        %v625 = vpop.f32.mrf.mxu0
        %v626 = vadd.f32 %v486, %v625
        %627 = vmatmul.bf16.gmra.mxu0 %v450
        %v628 = vpop.f32.mrf.mxu0
        %v629 = vadd.f32 %v486, %v628
        %v630 = vpop.f32.mrf.mxu0
        %v631 = vadd.f32 %v486, %v630
        %632 = vdwg.mxu0
        %633 = vmatpush.bf16.msra.mxu0 %v567
        %634 = vmatpush.bf16.msra.mxu0 %v566
        %635 = vmatpush.bf16.msra.mxu0 %v565
        %636 = vmatpush.bf16.msra.mxu0 %v564
        %637 = vmatpush.bf16.msra.mxu0 %v563
        %638 = vmatpush.bf16.msra.mxu0 %v562
        %639 = vmatpush.bf16.msra.mxu0 %v561
        %640 = vmatpush.bf16.msra.mxu0 %v560
        %641 = vmatmul.bf16.gmra.mxu0 %v437
        %v642 = vpop.f32.mrf.mxu0
        %v643 = vadd.f32 %v594, %v642
        %v644 = vpop.f32.mrf.mxu0
        %v645 = vadd.f32 %v596, %v644
        %646 = vmatmul.bf16.gmra.mxu0 %v439
        %v647 = vpop.f32.mrf.mxu0
        %v648 = vadd.f32 %v599, %v647
        %v649 = vpop.f32.mrf.mxu0
        %v650 = vadd.f32 %v601, %v649
        %651 = vmatmul.bf16.gmra.mxu0 %v441
        %v652 = vpop.f32.mrf.mxu0
        %v653 = vadd.f32 %v604, %v652
        %v654 = vpop.f32.mrf.mxu0
        %v655 = vadd.f32 %v606, %v654
        %656 = vmatmul.bf16.gmra.mxu0 %v443
        %v657 = vpop.f32.mrf.mxu0
        %v658 = vadd.f32 %v609, %v657
        %v659 = vpop.f32.mrf.mxu0
        %v660 = vadd.f32 %v611, %v659
        %661 = vmatmul.bf16.gmra.mxu0 %v445
        %v662 = vpop.f32.mrf.mxu0
        %v663 = vadd.f32 %v614, %v662
        %v664 = vpop.f32.mrf.mxu0
        %v665 = vadd.f32 %v616, %v664
        %666 = vmatmul.bf16.gmra.mxu0 %v447
        %v667 = vpop.f32.mrf.mxu0
        %v668 = vadd.f32 %v619, %v667
        %v669 = vpop.f32.mrf.mxu0
        %v670 = vadd.f32 %v621, %v669
        %671 = vmatmul.bf16.gmra.mxu0 %v449
        %v672 = vpop.f32.mrf.mxu0
        %v673 = vadd.f32 %v624, %v672
        %v674 = vpop.f32.mrf.mxu0
        %v675 = vadd.f32 %v626, %v674
        %676 = vmatmul.bf16.gmra.mxu0 %v451
        %v677 = vpop.f32.mrf.mxu0
        %v678 = vadd.f32 %v629, %v677
        %v679 = vpop.f32.mrf.mxu0
        %v680 = vadd.f32 %v631, %v679
        %681 = vdwg.mxu0
        %v682 = vpack.c.bf16 %v643, %v643
        %v683 = vpack.c.bf16 %v645, %v645
        %v684 = vpack.c.bf16 %v648, %v648
        %v685 = vpack.c.bf16 %v650, %v650
        %v686 = vpack.c.bf16 %v653, %v653
        %v687 = vpack.c.bf16 %v655, %v655
        %v688 = vpack.c.bf16 %v658, %v658
        %v689 = vpack.c.bf16 %v660, %v660
        %v690 = vpack.c.bf16 %v663, %v663
        %v691 = vpack.c.bf16 %v665, %v665
        %v692 = vpack.c.bf16 %v668, %v668
        %v693 = vpack.c.bf16 %v670, %v670
        %v694 = vpack.c.bf16 %v673, %v673
        %v695 = vpack.c.bf16 %v675, %v675
        %v696 = vpack.c.bf16 %v678, %v678
        %v697 = vpack.c.bf16 %v680, %v680
        %698 = vst [vmem:[%s218] sm:$0xf] %v682
        %699 = vst [vmem:[%s218 + $0x4] sm:$0xf] %v683
        %700 = vst [vmem:[%s218 + $0x8] sm:$0xf] %v684
        %701 = vst [vmem:[%s218 + $0xc] sm:$0xf] %v685
        %702 = vst [vmem:[%s218 + $0x10] sm:$0xf] %v686
        %703 = vst [vmem:[%s218 + $0x14] sm:$0xf] %v687
        %704 = vst [vmem:[%s218 + $0x18] sm:$0xf] %v688
        %705 = vst [vmem:[%s218 + $0x1c] sm:$0xf] %v689
        %706 = vst [vmem:[%s218 + $0x20] sm:$0xf] %v690
        %707 = vst [vmem:[%s218 + $0x24] sm:$0xf] %v691
        %708 = vst [vmem:[%s218 + $0x28] sm:$0xf] %v692
        %709 = vst [vmem:[%s218 + $0x2c] sm:$0xf] %v693
        %710 = vst [vmem:[%s218 + $0x30] sm:$0xf] %v694
        %711 = vst [vmem:[%s218 + $0x34] sm:$0xf] %v695
        %712 = vst [vmem:[%s218 + $0x38] sm:$0xf] %v696
        %713 = vst [vmem:[%s218 + $0x3c] sm:$0xf] %v697
        %s714 = sand.u32 %s137, 1
        %s715 = scalar_lea.sflag [#allocation3], %s714
        %s716 = sand.u32 %s137, 1
        %s717 = smul.addr %s716, 64
        %s718 = scalar_lea.vmem [#allocation2], %s717
        // Predicated region
        $region41: #{tpu_custom_call.1} parent=39 // pred_check
          %p719 = pneg %p147
        $region42: #{tpu_custom_call.1} parent=39 // pred_check_branch
          %721 = sbr.rel (%p719) target = $region44
        $region43: #{tpu_custom_call.1} parent=39 // pred_region
          %s722 = smul.u32 16, %s19
          %724 = vsyncadd %s715, 0
          %s725 = smul.addr %s722, 4
          %s726 = scalar_lea.hbm %s5, %s725
          %s727 = sshll.u32 %s718, 4
          %s728 = int_to_ptr.vmem [resolvable:$true] %s727
          %s729 = sshll.u32 %s726, 4
          %s730 = int_to_ptr.hbm [resolvable:$true] %s729
          %735 = dma.vmem_to_hbm [thread:$0]  %s728, 1024, %s730, %s715, 64, 64, 4
        $region44: #{tpu_custom_call.1} parent=39 // pred_fallthru
          _
      $region40: #{tpu_custom_call.1} parent=5 // pred_fallthru
        _
      %p736 = scmp.le.s32.totalorder 2, %s14
      // Predicated region
      $region45: #{tpu_custom_call.1} parent=5 // pred_check
        %p737 = pneg %p736
      $region46: #{tpu_custom_call.1} parent=5 // pred_check_branch
        %739 = sbr.rel (%p737) target = $region48
      $region47: #{tpu_custom_call.1} parent=5 // pred_region
        %s740 = ssub.s32 %s14, 2
        // Predicated region
        $region49: #{tpu_custom_call.1} parent=47 // pred_check
          %p741 = pneg %p153
        $region50: #{tpu_custom_call.1} parent=47 // pred_check_branch
          %743 = sbr.rel (%p741) target = $region52
        $region51: #{tpu_custom_call.1} parent=47 // pred_region
          %s744 = sand.u32 %s138, 1
          %s745 = scalar_lea.sflag [#allocation3], %s744
          %s746 = sand.u32 %s138, 1
          %s747 = smul.addr %s746, 64
          %s748 = scalar_lea.vmem [#allocation2], %s747
          %750 = dma.done %s745, 1024
        $region52: #{tpu_custom_call.1} parent=47 // pred_fallthru
          _
      $region48: #{tpu_custom_call.1} parent=5 // pred_fallthru
        _
    $region6: #{tpu_custom_call.1} parent=1 // loop_footer
      %s18 = sadd.s32 1, %s14
    $region7: #{tpu_custom_call.1} parent=1 // loop_footer_branch
      %13 = sbr.rel target = $region3
    $region8: #{tpu_custom_call.1} parent=1 // loop_exit
      _
    %751 = vsyncpa [#allocation3], 1
    %s752 = scalar_lea.sflag [#allocation3], 1
    %753 = vsyncpa %s752, 1

</llo_original>
